<compile_context>
chip_gen: v7x
topology: tpu7x:2x2x1
jax: 0.10.0
libtpu: 0.0.40
codegen_flags: <defaults>
</compile_context>

<pallas_src>
import functools
import math

import jax
import jax.numpy as jnp
from jax.experimental import pallas as pl
from jax.experimental.pallas import tpu as pltpu

LANE = 128
SUBLANE = 8


def _round_up(n, m):
    return ((n + m - 1) // m) * m


def mlp_base_kernel(x_ref, w1_ref, b1_ref, w2_ref, b2_ref, vw_ref, vb_ref,
                    out_ref, *, value_lane):
    """Whole fused MLPBase forward for one batch tile (everything in VMEM)."""
    x = x_ref[...]                                                    # (tB, num_inputs)

    # Fused layer 1: [actor_h1 | critic_h1 | pad] in one lane-dense matmul.
    h1 = jnp.tanh(
        jnp.dot(x, w1_ref[...], preferred_element_type=jnp.float32) + b1_ref[...])

    # Fused layer 2: block-diagonal weight -> [actor_h2 | critic_h2 | pad].
    h2 = jnp.tanh(
        jnp.dot(h1, w2_ref[...], preferred_element_type=jnp.float32) + b2_ref[...])

    # critic_linear as VPU multiply + lane reduction (vw is zero outside the
    # critic lanes), avoiding a 1-lane-output MXU matmul.
    value = jnp.sum(h2 * vw_ref[...], axis=-1, keepdims=True) + vb_ref[0]

    # Single lane-dense output: lanes [0, H) = actor hidden, lane H = value.
    lane = jax.lax.broadcasted_iota(jnp.int32, h2.shape, 1)
    out_ref[...] = jnp.where(lane == value_lane, value, h2).astype(out_ref.dtype)


def mlp_base_forward(x, masks, fused):
    """Wrapper calling the Pallas kernel. `masks` is unused (matches PyTorch)."""
    del masks  # unused in MLPBase.forward
    B, num_inputs = x.shape
    H = fused["hidden_size"]
    F = fused["w1"].shape[1]

    # Batch tiling: sublane-aligned tiles, gridded + parallel for large B.
    B_pad = _round_up(max(B, 1), SUBLANE)
    tile_b = min(B_pad, 512)
    B_pad = _round_up(B_pad, tile_b)
    if B_pad != B:
        x = jnp.pad(x, ((0, B_pad - B), (0, 0)))
    grid = (B_pad // tile_b,)

    flops = 2 * B_pad * (num_inputs * F + F * F + F)
    transcendentals = 2 * B_pad * F
    bytes_accessed = 4 * (B_pad * num_inputs + num_inputs * F + F
                          + F * F + F + F + 1 + B_pad * F)

    kernel = functools.partial(mlp_base_kernel, value_lane=H)

    out = pl.pallas_call(
        kernel,
        out_shape=jax.ShapeDtypeStruct((B_pad, F), jnp.float32),
        grid_spec=pltpu.PrefetchScalarGridSpec(
            num_scalar_prefetch=0,
            grid=grid,
            in_specs=[
                pl.BlockSpec((tile_b, num_inputs), lambda i: (i, 0)),   # x tile
                pl.BlockSpec(fused["w1"].shape, lambda i: (0, 0)),      # resident
                pl.BlockSpec(fused["b1"].shape, lambda i: (0, 0)),
                pl.BlockSpec(fused["w2"].shape, lambda i: (0, 0)),
                pl.BlockSpec(fused["b2"].shape, lambda i: (0, 0)),
                pl.BlockSpec(fused["vw"].shape, lambda i: (0, 0)),
                pl.BlockSpec(memory_space=pltpu.MemorySpace.SMEM),      # vb scalar
            ],
            out_specs=pl.BlockSpec((tile_b, F), lambda i: (i, 0)),
        ),
        compiler_params=pltpu.CompilerParams(
            dimension_semantics=("parallel",)),
        cost_estimate=pl.CostEstimate(
            flops=flops,
            transcendentals=transcendentals,
            bytes_accessed=bytes_accessed),
    )(x, fused["w1"], fused["b1"], fused["w2"], fused["b2"],
      fused["vw"], fused["vb"])

    hidden_actor = out[:B, :H]
    value = out[:B, H:H + 1]
    return value, hidden_actor


def init_params(key, num_inputs, hidden_size=64):
    """Deterministic init mirroring the PyTorch module:
    orthogonal weights with gain sqrt(2), zero biases. Weights stored as
    (in_features, out_features) so the kernel computes y = x @ W + b."""
    gain = math.sqrt(2.0)
    ortho = jax.nn.initializers.orthogonal(scale=gain)
    ks = jax.random.split(key, 5)

    def linear(k, fan_in, fan_out):
        w_t = ortho(k, (fan_out, fan_in), jnp.float32).T   # (in, out)
        b = jnp.zeros((1, fan_out), jnp.float32)
        return w_t, b

    aw1, ab1 = linear(ks[0], num_inputs, hidden_size)
    aw2, ab2 = linear(ks[1], hidden_size, hidden_size)
    cw1, cb1 = linear(ks[2], num_inputs, hidden_size)
    cw2, cb2 = linear(ks[3], hidden_size, hidden_size)
    vw, vb = linear(ks[4], hidden_size, 1)

    return dict(aw1=aw1, ab1=ab1, aw2=aw2, ab2=ab2,
                cw1=cw1, cb1=cb1, cw2=cw2, cb2=cb2,
                vw=vw, vb=vb, hidden_size=hidden_size, num_inputs=num_inputs)


def fuse_params(p):
    """Fuse actor/critic weights into lane-dense, zero-padded matrices."""
    H = p["hidden_size"]
    num_inputs = p["num_inputs"]
    F = _round_up(2 * H, LANE)    # fused feature width, multiple of 128 lanes

    w1 = jnp.zeros((num_inputs, F), jnp.float32)
    w1 = w1.at[:, :H].set(p["aw1"]).at[:, H:2 * H].set(p["cw1"])
    b1 = jnp.zeros((1, F), jnp.float32)
    b1 = b1.at[:, :H].set(p["ab1"]).at[:, H:2 * H].set(p["cb1"])

    w2 = jnp.zeros((F, F), jnp.float32)                   # block-diagonal
    w2 = w2.at[:H, :H].set(p["aw2"]).at[H:2 * H, H:2 * H].set(p["cw2"])
    b2 = jnp.zeros((1, F), jnp.float32)
    b2 = b2.at[:, :H].set(p["ab2"]).at[:, H:2 * H].set(p["cb2"])

    vw = jnp.zeros((1, F), jnp.float32)                   # zero outside critic lanes
    vw = vw.at[:, H:2 * H].set(p["vw"].reshape(1, H))
    vb = p["vb"].reshape(1)                               # (1,) scalar for SMEM

    return dict(w1=w1, b1=b1, w2=w2, b2=b2, vw=vw, vb=vb,
                hidden_size=H, num_inputs=num_inputs)


def reference_forward(x, p):
    ha = jnp.tanh(x @ p["aw1"] + p["ab1"])
    ha = jnp.tanh(ha @ p["aw2"] + p["ab2"])
    hc = jnp.tanh(x @ p["cw1"] + p["cb1"])
    hc = jnp.tanh(hc @ p["cw2"] + p["cb2"])
    v = hc @ p["vw"] + p["vb"]
    return v, ha


if __name__ == "__main__":
    key = jax.random.PRNGKey(0)
    k_param, k_x = jax.random.split(key)

    batch = 8
    num_inputs = 16
    hidden_size = 64   # module default; fused width 2H = 128 = one full lane tile

    params = init_params(k_param, num_inputs, hidden_size)
    fused = fuse_params(params)
    x = jax.random.normal(k_x, (batch, num_inputs), jnp.float32)
    masks = jnp.ones((batch, 1), jnp.float32)  # unused, as in PyTorch forward

    value, hidden_actor = mlp_base_forward(x, masks, fused)
    value = jax.block_until_ready(value)
    hidden_actor = jax.block_until_ready(hidden_actor)

    # sanity check against a plain-JAX reference using the unfused params
    v_ref, ha_ref = reference_forward(x, params)
    assert value.shape == (batch, 1)
    assert hidden_actor.shape == (batch, hidden_size)
    assert jnp.allclose(value, v_ref, atol=1e-5, rtol=1e-5)
    assert jnp.allclose(hidden_actor, ha_ref, atol=1e-5, rtol=1e-5)

    print("KERNEL_OK")
</pallas_src>

<mosaic_0001>
module attributes {stable_mosaic.version = 11 : i64} {
  func.func @mlp_base_kernel(%arg0: i32, %arg1: memref<8x16xf32, #tpu.memory_space<vmem>>, %arg2: memref<16x128xf32, #tpu.memory_space<vmem>>, %arg3: memref<1x128xf32, #tpu.memory_space<vmem>>, %arg4: memref<128x128xf32, #tpu.memory_space<vmem>>, %arg5: memref<1x128xf32, #tpu.memory_space<vmem>>, %arg6: memref<1x128xf32, #tpu.memory_space<vmem>>, %arg7: memref<1xf32, #tpu.memory_space<smem>>, %arg8: memref<8x128xf32, #tpu.memory_space<vmem>>) attributes {dimension_semantics = [#tpu.dimension_semantics<parallel>], iteration_bounds = array<i64: 1>, scalar_prefetch = 0 : i64, scratch_operands = 0 : i64, tpu.core_type = #tpu.core_type<tc>, window_params = [{transform_indices = @transform_0, window_bounds = array<i64: 8, 16>}, {pipeline_mode = #tpu.pipeline_mode<synchronous>, transform_indices = @transform_1, window_bounds = array<i64: 16, 128>}, {pipeline_mode = #tpu.pipeline_mode<synchronous>, transform_indices = @transform_2, window_bounds = array<i64: 1, 128>}, {pipeline_mode = #tpu.pipeline_mode<synchronous>, transform_indices = @transform_3, window_bounds = array<i64: 128, 128>}, {pipeline_mode = #tpu.pipeline_mode<synchronous>, transform_indices = @transform_4, window_bounds = array<i64: 1, 128>}, {pipeline_mode = #tpu.pipeline_mode<synchronous>, transform_indices = @transform_5, window_bounds = array<i64: 1, 128>}, {transform_indices = @transform_6, window_bounds = array<i64: 1>}, {transform_indices = @transform_7, window_bounds = array<i64: 8, 128>}]} {
    %c0 = arith.constant 0 : index
    %c0_0 = arith.constant 0 : index
    %0 = vector.load %arg1[%c0, %c0_0] : memref<8x16xf32, #tpu.memory_space<vmem>>, vector<8x16xf32>
    %c0_1 = arith.constant 0 : index
    %c0_2 = arith.constant 0 : index
    %1 = vector.load %arg2[%c0_1, %c0_2] : memref<16x128xf32, #tpu.memory_space<vmem>>, vector<16x128xf32>
    %cst = arith.constant dense<0.000000e+00> : vector<8x128xf32>
    %2 = tpu.matmul %0, %1, %cst {dimension_numbers = #tpu.dot_dimension_numbers<[1], [0], [0], [1], [0, 0, 1, 1], [], []>} : vector<8x16xf32>, vector<16x128xf32>, vector<8x128xf32> -> vector<8x128xf32>
    %c0_3 = arith.constant 0 : index
    %c0_4 = arith.constant 0 : index
    %3 = vector.load %arg3[%c0_3, %c0_4] : memref<1x128xf32, #tpu.memory_space<vmem>>, vector<1x128xf32>
    %4 = vector.broadcast %3 : vector<1x128xf32> to vector<8x128xf32>
    %5 = arith.addf %2, %4 : vector<8x128xf32>
    %6 = math.tanh %5 : vector<8x128xf32>
    %c0_5 = arith.constant 0 : index
    %c0_6 = arith.constant 0 : index
    %7 = vector.load %arg4[%c0_5, %c0_6] : memref<128x128xf32, #tpu.memory_space<vmem>>, vector<128x128xf32>
    %cst_7 = arith.constant dense<0.000000e+00> : vector<8x128xf32>
    %8 = tpu.matmul %6, %7, %cst_7 {dimension_numbers = #tpu.dot_dimension_numbers<[1], [0], [0], [1], [0, 0, 1, 1], [], []>} : vector<8x128xf32>, vector<128x128xf32>, vector<8x128xf32> -> vector<8x128xf32>
    %c0_8 = arith.constant 0 : index
    %c0_9 = arith.constant 0 : index
    %9 = vector.load %arg5[%c0_8, %c0_9] : memref<1x128xf32, #tpu.memory_space<vmem>>, vector<1x128xf32>
    %10 = vector.broadcast %9 : vector<1x128xf32> to vector<8x128xf32>
    %11 = arith.addf %8, %10 : vector<8x128xf32>
    %12 = math.tanh %11 : vector<8x128xf32>
    %c0_10 = arith.constant 0 : index
    %c0_11 = arith.constant 0 : index
    %13 = vector.load %arg6[%c0_10, %c0_11] : memref<1x128xf32, #tpu.memory_space<vmem>>, vector<1x128xf32>
    %14 = vector.broadcast %13 : vector<1x128xf32> to vector<8x128xf32>
    %15 = arith.mulf %12, %14 : vector<8x128xf32>
    %cst_12 = arith.constant dense<0.000000e+00> : vector<8xf32>
    %16 = vector.multi_reduction <add>, %15, %cst_12 [1] : vector<8x128xf32> to vector<8xf32>
    %17 = vector.shape_cast %16 : vector<8xf32> to vector<8x1xf32>
    %c0_13 = arith.constant 0 : index
    %18 = memref.load %arg7[%c0_13] : memref<1xf32, #tpu.memory_space<smem>>
    %19 = vector.broadcast %18 : f32 to vector<8x1xf32>
    %20 = arith.addf %17, %19 : vector<8x1xf32>
    %21 = tpu.iota {dimensions = array<i32: 1>} : vector<8x128xi32>
    %c64_i32 = arith.constant 64 : i32
    %22 = vector.broadcast %c64_i32 : i32 to vector<8x128xi32>
    %23 = arith.cmpi eq, %21, %22 : vector<8x128xi32>
    %24 = vector.shape_cast %20 : vector<8x1xf32> to vector<8x1xf32>
    %25 = vector.broadcast %24 : vector<8x1xf32> to vector<8x128xf32>
    %26 = arith.select %23, %25, %12 : vector<8x128xi1>, vector<8x128xf32>
    %c0_14 = arith.constant 0 : index
    %c0_15 = arith.constant 0 : index
    %27 = vector.load %arg8[%c0_14, %c0_15] : memref<8x128xf32, #tpu.memory_space<vmem>>, vector<8x128xf32>
    tpu.vector_store %arg8[%c0_14, %c0_15], %26 {strides = array<i32>} : memref<8x128xf32, #tpu.memory_space<vmem>>, vector<8x128xf32>,
    return
  }
  func.func @transform_0(%arg0: i32) -> (i32, i32) {
    %c0_i32 = arith.constant 0 : i32
    %c0_i32_0 = arith.constant 0 : i32
    return %arg0, %c0_i32 : i32, i32
  }
  func.func @transform_1(%arg0: i32) -> (i32, i32) {
    %c0_i32 = arith.constant 0 : i32
    %c0_i32_0 = arith.constant 0 : i32
    %c0_i32_1 = arith.constant 0 : i32
    return %c0_i32, %c0_i32_0 : i32, i32
  }
  func.func @transform_2(%arg0: i32) -> (i32, i32) {
    %c0_i32 = arith.constant 0 : i32
    %c0_i32_0 = arith.constant 0 : i32
    %c0_i32_1 = arith.constant 0 : i32
    return %c0_i32, %c0_i32_0 : i32, i32
  }
  func.func @transform_3(%arg0: i32) -> (i32, i32) {
    %c0_i32 = arith.constant 0 : i32
    %c0_i32_0 = arith.constant 0 : i32
    %c0_i32_1 = arith.constant 0 : i32
    return %c0_i32, %c0_i32_0 : i32, i32
  }
  func.func @transform_4(%arg0: i32) -> (i32, i32) {
    %c0_i32 = arith.constant 0 : i32
    %c0_i32_0 = arith.constant 0 : i32
    %c0_i32_1 = arith.constant 0 : i32
    return %c0_i32, %c0_i32_0 : i32, i32
  }
  func.func @transform_5(%arg0: i32) -> (i32, i32) {
    %c0_i32 = arith.constant 0 : i32
    %c0_i32_0 = arith.constant 0 : i32
    %c0_i32_1 = arith.constant 0 : i32
    return %c0_i32, %c0_i32_0 : i32, i32
  }
  func.func @transform_6(%arg0: i32) -> i32 {
    %c0_i32 = arith.constant 0 : i32
    %c0_i32_0 = arith.constant 0 : i32
    return %c0_i32 : i32
  }
  func.func @transform_7(%arg0: i32) -> (i32, i32) {
    %c0_i32 = arith.constant 0 : i32
    %c0_i32_0 = arith.constant 0 : i32
    return %arg0, %c0_i32 : i32, i32
  }
}

</mosaic_0001>

<llo_original>
// kernel: tpu_custom_call.1
$region0: #{tpu_custom_call.1}
  #allocation0 [shape = 'u32[]', space=smem, size = 0x4, offset = 0x4, fixed_abs, tag = 'smem constant byte address 0x4 - core index']
  #allocation1 [shape = 'u32[144,128]{1,0:T(1,128)}', space=vmem, size = 0x12000, scoped, tag = 'internal scratch']
  #allocation2 [shape = 'f32[1]{0:T(128)S(6)}', space=smem, size = 0x200, scoped, tag = 'scoped memory for tpu_custom_call.1']
  %s0 = inlined_call_operand.hbm [shape: f32[8,16], index: 0, kind: input, shape index: {}]
  %s1 = inlined_call_operand.hbm [shape: f32[16,128], index: 1, kind: input, shape index: {}]
  %s2 = inlined_call_operand.vmem [shape: f32[1,128], index: 2, kind: input, shape index: {}]
  %s3 = inlined_call_operand.hbm [shape: f32[128,128], index: 3, kind: input, shape index: {}]
  %s4 = inlined_call_operand.vmem [shape: f32[1,128], index: 4, kind: input, shape index: {}]
  %s5 = inlined_call_operand.vmem [shape: f32[1,128], index: 5, kind: input, shape index: {}]
  %s6 = inlined_call_operand.<no memory space> [shape: f32[1], index: 6, kind: input, shape index: {}]
  %s7 = inlined_call_operand.hbm [shape: f32[8,128], index: 7, kind: output, shape index: {}]
  %s8 = sld [smem:[#allocation0]]
  $region50: #{tpu_custom_call.1} parent=0
    _
  %s10 = ssub.s32 1, %s8
  %s11 = scalar_select 0, %s10, %s8
  %12 = sst [smem:[#allocation2]] %s6
  $region1: #{tpu_custom_call.1} parent=0
    #allocation3 [shape = 'u8[4096]{0}', space=vmem, size = 0x1000, scoped, tag = 'input window, operand 0, single buffered']
    #allocation4 [shape = 's32[1]{0}', space=sflag, size = 0x4, scoped, tag = 'scoped memory for tpu_custom_call.1']
    #allocation5 [shape = 's32[1]{0}', space=sflag, size = 0x4, scoped, tag = 'scoped memory for tpu_custom_call.1']
    #allocation6 [shape = 'u8[8192]{0}', space=vmem, size = 0x2000, scoped, tag = 'input window, operand 1, single buffered']
    #allocation7 [shape = 's32[1]{0}', space=sflag, size = 0x4, scoped, tag = 'scoped memory for tpu_custom_call.1']
    #allocation8 [shape = 'u8[65536]{0}', space=vmem, size = 0x10000, scoped, tag = 'input window, operand 3, single buffered']
    #allocation9 [shape = 'u8[4096]{0}', space=vmem, size = 0x1000, scoped, tag = 'output window, operand 0, single buffered']
    %13 = vsyncpa [#allocation4], 0
    %14 = vsyncpa [#allocation7], 0
    %15 = vsyncpa [#allocation5], 0
    // Predicated region
    $region2: #{tpu_custom_call.1} parent=1 // pred_check
      _
    $region3: #{tpu_custom_call.1} parent=1 // pred_check_branch
      %17 = sbr.rel (0) target = $region5
    $region4: #{tpu_custom_call.1} parent=1 // pred_region
      %s19 = ssub.s32 128, 128
      %20 = vsyncadd [#allocation4], %s19
      %s22 = sshll.u32 [#allocation3], 4
      %s23 = int_to_ptr.vmem [resolvable:$true] %s22
      %25 = dma.hbm_to_vmem [thread:$0]  %s0, 128, %s23, [#allocation4]
    $region5: #{tpu_custom_call.1} parent=1 // pred_fallthru
      _
    // Predicated region
    $region6: #{tpu_custom_call.1} parent=1 // pred_check
      _
    $region7: #{tpu_custom_call.1} parent=1 // pred_check_branch
      %27 = sbr.rel (0) target = $region9
    $region8: #{tpu_custom_call.1} parent=1 // pred_region
      %s29 = ssub.s32 256, 256
      %30 = vsyncadd [#allocation7], %s29
      %s31 = sshll.u32 [#allocation6], 4
      %s32 = int_to_ptr.vmem [resolvable:$true] %s31
      %37 = dma.hbm_to_vmem [thread:$0]  %s1, 256, %s32, [#allocation7], 128, 128, 8
    $region9: #{tpu_custom_call.1} parent=1 // pred_fallthru
      _
    // Predicated region
    $region10: #{tpu_custom_call.1} parent=1 // pred_check
      _
    $region11: #{tpu_custom_call.1} parent=1 // pred_check_branch
      %39 = sbr.rel (0) target = $region13
    $region12: #{tpu_custom_call.1} parent=1 // pred_region
      _
    $region13: #{tpu_custom_call.1} parent=1 // pred_fallthru
      _
    // Predicated region
    $region14: #{tpu_custom_call.1} parent=1 // pred_check
      _
    $region15: #{tpu_custom_call.1} parent=1 // pred_check_branch
      %41 = sbr.rel (0) target = $region17
    $region16: #{tpu_custom_call.1} parent=1 // pred_region
      %s43 = ssub.s32 2048, 2048
      %44 = vsyncadd [#allocation7], %s43
      %s45 = sshll.u32 [#allocation8], 4
      %s46 = int_to_ptr.vmem [resolvable:$true] %s45
      %51 = dma.hbm_to_vmem [thread:$0]  %s3, 2048, %s46, [#allocation7], 128, 128, 8
    $region17: #{tpu_custom_call.1} parent=1 // pred_fallthru
      _
    // Predicated region
    $region18: #{tpu_custom_call.1} parent=1 // pred_check
      _
    $region19: #{tpu_custom_call.1} parent=1 // pred_check_branch
      %53 = sbr.rel (0) target = $region21
    $region20: #{tpu_custom_call.1} parent=1 // pred_region
      _
    $region21: #{tpu_custom_call.1} parent=1 // pred_fallthru
      _
    // Predicated region
    $region22: #{tpu_custom_call.1} parent=1 // pred_check
      _
    $region23: #{tpu_custom_call.1} parent=1 // pred_check_branch
      %55 = sbr.rel (0) target = $region25
    $region24: #{tpu_custom_call.1} parent=1 // pred_region
      _
    $region25: #{tpu_custom_call.1} parent=1 // pred_fallthru
      _
    // Predicated region
    $region26: #{tpu_custom_call.1} parent=1 // pred_check
      _
    $region27: #{tpu_custom_call.1} parent=1 // pred_check_branch
      %57 = sbr.rel (0) target = $region29
    $region28: #{tpu_custom_call.1} parent=1 // pred_region
      _
    $region29: #{tpu_custom_call.1} parent=1 // pred_fallthru
      _
    // Predicated region
    $region30: #{tpu_custom_call.1} parent=1 // pred_check
      _
    $region31: #{tpu_custom_call.1} parent=1 // pred_check_branch
      %59 = sbr.rel (0) target = $region33
    $region32: #{tpu_custom_call.1} parent=1 // pred_region
      %60 = dma.done [#allocation4], 128
    $region33: #{tpu_custom_call.1} parent=1 // pred_fallthru
      _
    // Predicated region
    $region34: #{tpu_custom_call.1} parent=1 // pred_check
      _
    $region35: #{tpu_custom_call.1} parent=1 // pred_check_branch
      %62 = sbr.rel (0) target = $region37
    $region36: #{tpu_custom_call.1} parent=1 // pred_region
      %63 = dma.done [#allocation7], 256
    $region37: #{tpu_custom_call.1} parent=1 // pred_fallthru
      _
    // Predicated region
    $region38: #{tpu_custom_call.1} parent=1 // pred_check
      _
    $region39: #{tpu_custom_call.1} parent=1 // pred_check_branch
      %65 = sbr.rel (0) target = $region41
    $region40: #{tpu_custom_call.1} parent=1 // pred_region
      %66 = dma.done [#allocation7], 2048
    $region41: #{tpu_custom_call.1} parent=1 // pred_fallthru
      _
    %v67 = vld [vmem:[#allocation3] sm:$0xff]
    %v68 = vld [vmem:[#allocation6] sm:$0xff]
    %v69 = vld [vmem:[#allocation6 + $0x8] sm:$0xff]
    %v70 = vld [vmem:[%s2] sm:$0x1]
    %v72 = vlaneseq
    %v73 = vshrl.u32 %v72, 7
    %v74 = vsub.s32 0, %v73
    %v75 = vrot.slane %v70, %v74
    %vm77 = vcmask 130048
    %v79 = vsel %vm77, %v67, 0
    %81 = vmatprep.subr.mxu0 0.0
    %82 = vmatpush1.msra.mxu0 %v68
    %83 = vmatprep.subr.mxu0 0.0
    %84 = vmatpush1.msra.mxu0 %v69
    %85 = vmatprep.subr.mxu0 0.0
    %86 = vmatpush1.msra.mxu0 0.0
    %87 = vmatprep.subr.mxu0 0.0
    %88 = vmatpush1.msra.mxu0 0.0
    %89 = vmatprep.subr.mxu0 0.0
    %90 = vmatpush1.msra.mxu0 0.0
    %91 = vmatprep.subr.mxu0 0.0
    %92 = vmatpush1.msra.mxu0 0.0
    %93 = vmatprep.subr.mxu0 0.0
    %94 = vmatpush1.msra.mxu0 0.0
    %95 = vmatprep.subr.mxu0 0.0
    %96 = vmatpush1.msra.mxu0 0.0
    %97 = vmatprep.subr.mxu0 0.0
    %98 = vmatpush1.msra.mxu0 0.0
    %99 = vmatprep.subr.mxu0 0.0
    %100 = vmatpush1.msra.mxu0 0.0
    %101 = vmatprep.subr.mxu0 0.0
    %102 = vmatpush1.msra.mxu0 0.0
    %103 = vmatprep.subr.mxu0 0.0
    %104 = vmatpush1.msra.mxu0 0.0
    %105 = vmatprep.subr.mxu0 0.0
    %106 = vmatpush1.msra.mxu0 0.0
    %107 = vmatprep.subr.mxu0 0.0
    %108 = vmatpush1.msra.mxu0 0.0
    %109 = vmatprep.subr.mxu0 0.0
    %110 = vmatpush1.msra.mxu0 0.0
    %111 = vmatprep.subr.mxu0 0.0
    %112 = vmatpush1.msra.mxu0 0.0
    %113 = vmatprep.subr.mxu0 0.0
    %114 = vmatpush1.msra.mxu0 0.0
    %115 = vmatprep.subr.mxu0 0.0
    %116 = vmatpush1.msra.mxu0 0.0
    %117 = vmatprep.subr.mxu0 0.0
    %118 = vmatpush1.msra.mxu0 0.0
    %119 = vmatprep.subr.mxu0 0.0
    %120 = vmatpush1.msra.mxu0 0.0
    %121 = vmatprep.subr.mxu0 0.0
    %122 = vmatpush1.msra.mxu0 0.0
    %123 = vmatprep.subr.mxu0 0.0
    %124 = vmatpush1.msra.mxu0 0.0
    %125 = vmatprep.subr.mxu0 0.0
    %126 = vmatpush1.msra.mxu0 0.0
    %127 = vmatprep.subr.mxu0 0.0
    %128 = vmatpush1.msra.mxu0 0.0
    %129 = vmatprep.subr.mxu0 0.0
    %130 = vmatpush1.msra.mxu0 0.0
    %131 = vmatprep.subr.mxu0 0.0
    %132 = vmatpush1.msra.mxu0 0.0
    %133 = vmatprep.subr.mxu0 0.0
    %134 = vmatpush1.msra.mxu0 0.0
    %135 = vmatprep.subr.mxu0 0.0
    %136 = vmatpush1.msra.mxu0 0.0
    %137 = vmatprep.subr.mxu0 0.0
    %138 = vmatpush1.msra.mxu0 0.0
    %139 = vmatprep.subr.mxu0 0.0
    %140 = vmatpush1.msra.mxu0 0.0
    %141 = vmatprep.subr.mxu0 0.0
    %142 = vmatpush1.msra.mxu0 0.0
    %143 = vmatprep.subr.mxu0 0.0
    %144 = vmatpush1.msra.mxu0 0.0
    %145 = vmatprep.mubr.f32.mxu0 0.0
    %146 = vmatmul.mubr.f32.gmra.mrb[0].mxu0 %v79
    %v147 = vpop.f32.mrb[0].mxu0
    %v148 = vadd.f32 %v75, %v147
    %v149 = vpop.f32.mrb[0].mxu0
    %150 = vdwg.mxu0
    %v151 = vtanh.pop %v148
    %v152 = vld [vmem:[#allocation8] sm:$0xff]
    %v153 = vld [vmem:[#allocation8 + $0x8] sm:$0xff]
    %v154 = vld [vmem:[#allocation8 + $0x10] sm:$0xff]
    %v155 = vld [vmem:[#allocation8 + $0x18] sm:$0xff]
    %v156 = vld [vmem:[#allocation8 + $0x20] sm:$0xff]
    %v157 = vld [vmem:[#allocation8 + $0x28] sm:$0xff]
    %v158 = vld [vmem:[#allocation8 + $0x30] sm:$0xff]
    %v159 = vld [vmem:[#allocation8 + $0x38] sm:$0xff]
    %v160 = vld [vmem:[#allocation8 + $0x40] sm:$0xff]
    %v161 = vld [vmem:[#allocation8 + $0x48] sm:$0xff]
    %v162 = vld [vmem:[#allocation8 + $0x50] sm:$0xff]
    %v163 = vld [vmem:[#allocation8 + $0x58] sm:$0xff]
    %v164 = vld [vmem:[#allocation8 + $0x60] sm:$0xff]
    %v165 = vld [vmem:[#allocation8 + $0x68] sm:$0xff]
    %v166 = vld [vmem:[#allocation8 + $0x70] sm:$0xff]
    %v167 = vld [vmem:[#allocation8 + $0x78] sm:$0xff]
    %v168 = vld [vmem:[%s4] sm:$0x1]
    %v170 = vlaneseq
    %v171 = vshrl.u32 %v170, 7
    %v172 = vsub.s32 0, %v171
    %v173 = vrot.slane %v168, %v172
    %175 = vmatprep.subr.mxu0 0.0
    %176 = vmatpush1.msra.mxu0 %v152
    %177 = vmatprep.subr.mxu0 0.0
    %178 = vmatpush1.msra.mxu0 %v153
    %179 = vmatprep.subr.mxu0 0.0
    %180 = vmatpush1.msra.mxu0 %v154
    %181 = vmatprep.subr.mxu0 0.0
    %182 = vmatpush1.msra.mxu0 %v155
    %183 = vmatprep.subr.mxu0 0.0
    %184 = vmatpush1.msra.mxu0 %v156
    %185 = vmatprep.subr.mxu0 0.0
    %186 = vmatpush1.msra.mxu0 %v157
    %187 = vmatprep.subr.mxu0 0.0
    %188 = vmatpush1.msra.mxu0 %v158
    %189 = vmatprep.subr.mxu0 0.0
    %190 = vmatpush1.msra.mxu0 %v159
    %191 = vmatprep.subr.mxu0 0.0
    %192 = vmatpush1.msra.mxu0 %v160
    %193 = vmatprep.subr.mxu0 0.0
    %194 = vmatpush1.msra.mxu0 %v161
    %195 = vmatprep.subr.mxu0 0.0
    %196 = vmatpush1.msra.mxu0 %v162
    %197 = vmatprep.subr.mxu0 0.0
    %198 = vmatpush1.msra.mxu0 %v163
    %199 = vmatprep.subr.mxu0 0.0
    %200 = vmatpush1.msra.mxu0 %v164
    %201 = vmatprep.subr.mxu0 0.0
    %202 = vmatpush1.msra.mxu0 %v165
    %203 = vmatprep.subr.mxu0 0.0
    %204 = vmatpush1.msra.mxu0 %v166
    %205 = vmatprep.subr.mxu0 0.0
    %206 = vmatpush1.msra.mxu0 %v167
    %207 = vmatprep.subr.mxu0 0.0
    %208 = vmatpush1.msra.mxu0 0.0
    %209 = vmatprep.subr.mxu0 0.0
    %210 = vmatpush1.msra.mxu0 0.0
    %211 = vmatprep.subr.mxu0 0.0
    %212 = vmatpush1.msra.mxu0 0.0
    %213 = vmatprep.subr.mxu0 0.0
    %214 = vmatpush1.msra.mxu0 0.0
    %215 = vmatprep.subr.mxu0 0.0
    %216 = vmatpush1.msra.mxu0 0.0
    %217 = vmatprep.subr.mxu0 0.0
    %218 = vmatpush1.msra.mxu0 0.0
    %219 = vmatprep.subr.mxu0 0.0
    %220 = vmatpush1.msra.mxu0 0.0
    %221 = vmatprep.subr.mxu0 0.0
    %222 = vmatpush1.msra.mxu0 0.0
    %223 = vmatprep.subr.mxu0 0.0
    %224 = vmatpush1.msra.mxu0 0.0
    %225 = vmatprep.subr.mxu0 0.0
    %226 = vmatpush1.msra.mxu0 0.0
    %227 = vmatprep.subr.mxu0 0.0
    %228 = vmatpush1.msra.mxu0 0.0
    %229 = vmatprep.subr.mxu0 0.0
    %230 = vmatpush1.msra.mxu0 0.0
    %231 = vmatprep.subr.mxu0 0.0
    %232 = vmatpush1.msra.mxu0 0.0
    %233 = vmatprep.subr.mxu0 0.0
    %234 = vmatpush1.msra.mxu0 0.0
    %235 = vmatprep.subr.mxu0 0.0
    %236 = vmatpush1.msra.mxu0 0.0
    %237 = vmatprep.subr.mxu0 0.0
    %238 = vmatpush1.msra.mxu0 0.0
    %239 = vmatprep.mubr.f32.mxu0 0.0
    %240 = vmatmul.mubr.f32.gmra.mrb[0].mxu0 %v151
    %v241 = vpop.f32.mrb[0].mxu0
    %v242 = vadd.f32 %v173, %v241
    %v243 = vpop.f32.mrb[0].mxu0
    %244 = vdwg.mxu0
    %v245 = vtanh.pop %v242
    %v246 = vld [vmem:[%s5] sm:$0x1]
    %v248 = vlaneseq
    %v249 = vshrl.u32 %v248, 7
    %v250 = vsub.s32 0, %v249
    %v251 = vrot.slane %v246, %v250
    %v253 = vmul.f32 %v245, %v251
    %254 = vadd.xlane.f32.xlu0 %v253
    %v255 = vpop.xlane.xlu0 %254
    %s256 = sld [smem:[#allocation2]]
    %v257 = vstv %s256
    %v258 = vadd.f32 %v255, %v257
    %v259 = vlaneseq
    %v260 = vand.u32 %v259, 127
    %vm261 = vcmp.eq.s32.totalorder %v260, 64
    %v262 = vsel %vm261, %v258, %v245
    %263 = vst [vmem:[#allocation9] sm:$0xff] %v262
    // Predicated region
    $region42: #{tpu_custom_call.1} parent=1 // pred_check
      _
    $region43: #{tpu_custom_call.1} parent=1 // pred_check_branch
      %265 = sbr.rel (0) target = $region45
    $region44: #{tpu_custom_call.1} parent=1 // pred_region
      %s267 = ssub.s32 128, 128
      %268 = vsyncadd [#allocation5], %s267
      %s270 = sshll.u32 [#allocation9], 4
      %s271 = int_to_ptr.vmem [resolvable:$true] %s270
      %273 = dma.vmem_to_hbm [thread:$0]  %s271, 128, %s7, [#allocation5]
    $region45: #{tpu_custom_call.1} parent=1 // pred_fallthru
      _
    // Predicated region
    $region46: #{tpu_custom_call.1} parent=1 // pred_check
      _
    $region47: #{tpu_custom_call.1} parent=1 // pred_check_branch
      %275 = sbr.rel (0) target = $region49
    $region48: #{tpu_custom_call.1} parent=1 // pred_region
      %276 = dma.done [#allocation5], 128
    $region49: #{tpu_custom_call.1} parent=1 // pred_fallthru
      _
    %277 = vsyncpa [#allocation4], 1
    %278 = vsyncpa [#allocation7], 1
    %279 = vsyncpa [#allocation5], 1

</llo_original>
